<compile_context>
chip_gen: v7x
topology: tpu7x:2x2x1
jax: 0.10.0
libtpu: 0.0.40
codegen_flags: <defaults>
</compile_context>

<pallas_src>
import jax
import jax.numpy as jnp
from jax.experimental import pallas as pl
from jax.experimental.pallas import tpu as pltpu

LANES = 128              # vreg lane width: last block dim must be a multiple of 128
TM_MAX = 2048            # rows per tile -> 1 MiB f32 input tile (fits all VMEM budgets)
SMALL_N_THRESHOLD = 1024 # below this, plain jnp is faster than a pallas_call launch

_SQRT_2_OVER_PI = 0.7978845608028654
_C3 = 0.044715 * _SQRT_2_OVER_PI   # folded cubic-term constant


def _gelu_linear_kernel(w_ref, b_ref, x_ref, o_ref):
    # w_ref, b_ref: (1, 1) scalars in SMEM; x_ref/o_ref: (TM, 128) f32 tiles in VMEM.
    w = w_ref[0, 0]
    b = b_ref[0, 0]
    x = x_ref[...]

    v1 = x * w + b                                        # Linear(1, 1) == affine
    half = 0.5 * v1
    # Horner-factored: sqrt(2/pi) * (v1 + 0.044715 v1^3) = v1*(c0 + c3*v1^2)
    u = v1 * (_SQRT_2_OVER_PI + _C3 * (v1 * v1))          # VALU (reduced op count)
    o_ref[...] = half + half * jnp.tanh(u)                # tanh on EUP


def _gelu_linear_jnp(v, w, b):
    v1 = v * w + b
    u = v1 * (_SQRT_2_OVER_PI + _C3 * (v1 * v1))
    return 0.5 * v1 * (1.0 + jnp.tanh(u))


def _round_up(x, m):
    return ((x + m - 1) // m) * m


def model_forward(v, weight, bias):
    """v: (N, 1) f32; weight: (1, 1) f32; bias: (1,) f32 -> (N, 1) f32.

    Note: tm/grid selection requires static shapes (no shape polymorphism).
    """
    orig_shape = v.shape
    n_elems = v.size

    w_scalar = jnp.asarray(weight, jnp.float32).reshape(())
    b_scalar = jnp.asarray(bias, jnp.float32).reshape(())

    # Tiny inputs: kernel launch + layout plumbing dwarfs any benefit.
    if n_elems < SMALL_N_THRESHOLD:
        return _gelu_linear_jnp(
            v.astype(jnp.float32), w_scalar, b_scalar
        ).reshape(orig_shape)

    w = w_scalar.reshape(1, 1)
    b = b_scalar.reshape(1, 1)

    # ---- lane-dense layout: pad only to the next multiple of 128 ----
    flat = jnp.ravel(v).astype(jnp.float32)
    padded_elems = _round_up(n_elems, LANES)
    pad = padded_elems - n_elems
    if pad:
        flat = jnp.pad(flat, (0, pad))        # skipped entirely when N % 128 == 0
    rows = padded_elems // LANES
    x2d = flat.reshape(rows, LANES)           # free view when no padding

    # Tile height: multiple of 8 sublanes, capped at TM_MAX, and sized so the
    # grid has >= 2 steps (both TensorCores busy on v7x).  Ragged last tile is
    # masked automatically by Pallas — no row padding.
    tm = min(TM_MAX, max(8, _round_up(pl.cdiv(rows, 2), 8)))
    grid = (pl.cdiv(rows, tm),)

    total = rows * LANES
    cost = pl.CostEstimate(
        flops=10 * total,
        transcendentals=total,
        bytes_accessed=2 * total * 4,         # mem-bound: one read + one write pass
    )

    out2d = pl.pallas_call(
        _gelu_linear_kernel,
        out_shape=jax.ShapeDtypeStruct((rows, LANES), jnp.float32),
        grid=grid,
        in_specs=[
            pl.BlockSpec(memory_space=pltpu.MemorySpace.SMEM),   # weight scalar
            pl.BlockSpec(memory_space=pltpu.MemorySpace.SMEM),   # bias scalar
            pl.BlockSpec((tm, LANES), lambda i: (i, 0)),         # input row tile
        ],
        out_specs=pl.BlockSpec((tm, LANES), lambda i: (i, 0)),
        compiler_params=pltpu.CompilerParams(
            dimension_semantics=("parallel",),                   # megacore-friendly
        ),
        cost_estimate=cost,
    )(w, b, x2d)

    if pad:
        return out2d.reshape(-1)[:n_elems].reshape(orig_shape)
    return out2d.reshape(orig_shape)                              # free view


def _reference(v, weight, bias):
    v1 = v @ weight.T + bias
    v2 = v1 * 0.5
    v3 = v1 + v1 * v1 * v1 * 0.044715
    v4 = v3 * 0.7978845608028654
    v5 = jnp.tanh(v4)
    return v2 * (v5 + 1.0)


if __name__ == "__main__":
    key = jax.random.PRNGKey(0)
    kw, kb, kx1, kx2 = jax.random.split(key, 4)

    # Deterministic Linear(1, 1) parameters (torch-style uniform(-1, 1), fan_in=1)
    weight = jax.random.uniform(kw, (1, 1), jnp.float32, minval=-1.0, maxval=1.0)
    bias = jax.random.uniform(kb, (1,), jnp.float32, minval=-1.0, maxval=1.0)

    # 1) Same input as the PyTorch script: (3, 1) — routed to the jnp fast path.
    v_small = jnp.array([[0.1], [0.2], [0.3]], dtype=jnp.float32)
    out_small = model_forward(v_small, weight, bias)
    jax.block_until_ready(out_small)
    ref_small = _reference(v_small, weight, bias)
    assert out_small.shape == (3, 1) and out_small.dtype == jnp.float32
    assert jnp.allclose(out_small, ref_small, atol=1e-6, rtol=1e-5)

    # 2) N not a multiple of 128: exercises the lane-padding + ragged-tile path.
    v_mid = jax.random.normal(kx1, (12_345, 1), jnp.float32)
    out_mid = model_forward(v_mid, weight, bias)
    jax.block_until_ready(out_mid)
    ref_mid = _reference(v_mid, weight, bias)
    assert out_mid.shape == v_mid.shape
    assert jnp.allclose(out_mid, ref_mid, atol=1e-5, rtol=1e-5)

    # 3) Larger N (multiple of 128): no padding, multi-tile parallel grid.
    v_big = jax.random.normal(kx2, (400_000, 1), jnp.float32)
    out_big = model_forward(v_big, weight, bias)
    jax.block_until_ready(out_big)
    ref_big = _reference(v_big, weight, bias)
    assert out_big.shape == v_big.shape
    assert jnp.allclose(out_big, ref_big, atol=1e-5, rtol=1e-5)

    print("KERNEL_OK")
</pallas_src>

<mosaic_0001>
module attributes {stable_mosaic.version = 11 : i64} {
  func.func @_gelu_linear_kernel(%arg0: i32, %arg1: memref<1x1xf32, #tpu.memory_space<smem>>, %arg2: memref<1x1xf32, #tpu.memory_space<smem>>, %arg3: memref<56x128xf32, #tpu.memory_space<vmem>>, %arg4: memref<56x128xf32, #tpu.memory_space<vmem>>) attributes {dimension_semantics = [#tpu.dimension_semantics<parallel>], iteration_bounds = array<i64: 2>, scalar_prefetch = 0 : i64, scratch_operands = 0 : i64, tpu.core_type = #tpu.core_type<tc>, window_params = [{transform_indices = @transform_0, window_bounds = array<i64: 1, 1>}, {transform_indices = @transform_1, window_bounds = array<i64: 1, 1>}, {transform_indices = @transform_2, window_bounds = array<i64: 56, 128>}, {transform_indices = @transform_3, window_bounds = array<i64: 56, 128>}]} {
    %c0 = arith.constant 0 : index
    %c0_0 = arith.constant 0 : index
    %0 = memref.load %arg1[%c0, %c0_0] : memref<1x1xf32, #tpu.memory_space<smem>>
    %c0_1 = arith.constant 0 : index
    %c0_2 = arith.constant 0 : index
    %1 = memref.load %arg2[%c0_1, %c0_2] : memref<1x1xf32, #tpu.memory_space<smem>>
    %c0_3 = arith.constant 0 : index
    %c0_4 = arith.constant 0 : index
    %2 = vector.load %arg3[%c0_3, %c0_4] : memref<56x128xf32, #tpu.memory_space<vmem>>, vector<56x128xf32>
    %3 = vector.broadcast %0 : f32 to vector<56x128xf32>
    %4 = arith.mulf %2, %3 : vector<56x128xf32>
    %5 = vector.broadcast %1 : f32 to vector<56x128xf32>
    %6 = arith.addf %4, %5 : vector<56x128xf32>
    %cst = arith.constant 5.000000e-01 : f32
    %7 = vector.broadcast %cst : f32 to vector<56x128xf32>
    %8 = arith.mulf %7, %6 : vector<56x128xf32>
    %9 = arith.mulf %6, %6 : vector<56x128xf32>
    %cst_5 = arith.constant 0.0356774069 : f32
    %10 = vector.broadcast %cst_5 : f32 to vector<56x128xf32>
    %11 = arith.mulf %10, %9 : vector<56x128xf32>
    %cst_6 = arith.constant 0.797884583 : f32
    %12 = vector.broadcast %cst_6 : f32 to vector<56x128xf32>
    %13 = arith.addf %12, %11 : vector<56x128xf32>
    %14 = arith.mulf %6, %13 : vector<56x128xf32>
    %15 = math.tanh %14 : vector<56x128xf32>
    %16 = arith.mulf %8, %15 : vector<56x128xf32>
    %17 = arith.addf %8, %16 : vector<56x128xf32>
    %c0_7 = arith.constant 0 : index
    %c0_8 = arith.constant 0 : index
    %18 = vector.load %arg4[%c0_7, %c0_8] : memref<56x128xf32, #tpu.memory_space<vmem>>, vector<56x128xf32>
    tpu.vector_store %arg4[%c0_7, %c0_8], %17 {strides = array<i32>} : memref<56x128xf32, #tpu.memory_space<vmem>>, vector<56x128xf32>,
    return
  }
  func.func @transform_0(%arg0: i32) -> (i32, i32) {
    %c0_i32 = arith.constant 0 : i32
    %c0_i32_0 = arith.constant 0 : i32
    %c0_i32_1 = arith.constant 0 : i32
    return %c0_i32, %c0_i32_0 : i32, i32
  }
  func.func @transform_1(%arg0: i32) -> (i32, i32) {
    %c0_i32 = arith.constant 0 : i32
    %c0_i32_0 = arith.constant 0 : i32
    %c0_i32_1 = arith.constant 0 : i32
    return %c0_i32, %c0_i32_0 : i32, i32
  }
  func.func @transform_2(%arg0: i32) -> (i32, i32) {
    %c0_i32 = arith.constant 0 : i32
    %c0_i32_0 = arith.constant 0 : i32
    return %arg0, %c0_i32 : i32, i32
  }
  func.func @transform_3(%arg0: i32) -> (i32, i32) {
    %c0_i32 = arith.constant 0 : i32
    %c0_i32_0 = arith.constant 0 : i32
    return %arg0, %c0_i32 : i32, i32
  }
}

</mosaic_0001>

<llo_original>
// kernel: tpu_custom_call.1
$region0: #{tpu_custom_call.1}
  #allocation0 [shape = 'u32[]', space=smem, size = 0x4, offset = 0x4, fixed_abs, tag = 'smem constant byte address 0x4 - core index']
  #allocation1 [shape = 'u32[144,128]{1,0:T(1,128)}', space=vmem, size = 0x12000, scoped, tag = 'internal scratch']
  #allocation2 [shape = 'f32[1,1]{1,0:T(1,128)S(6)}', space=smem, size = 0x200, scoped, tag = 'scoped memory for tpu_custom_call.1']
  #allocation3 [shape = 'f32[1,1]{1,0:T(1,128)S(6)}', space=smem, size = 0x200, scoped, tag = 'scoped memory for tpu_custom_call.1']
  %s0 = inlined_call_operand.<no memory space> [shape: f32[1,1], index: 0, kind: input, shape index: {}]
  %s1 = inlined_call_operand.<no memory space> [shape: f32[1,1], index: 1, kind: input, shape index: {}]
  %s2 = inlined_call_operand.hbm [shape: f32[97,128], index: 2, kind: input, shape index: {}]
  %s3 = inlined_call_operand.hbm [shape: f32[97,128], index: 3, kind: output, shape index: {}]
  %s4 = sld [smem:[#allocation0]]
  $region49: #{tpu_custom_call.1} parent=0
    _
  %s6 = ssub.s32 1, %s4
  %s7 = scalar_select 0, %s6, %s4
  %8 = sst [smem:[#allocation2]] %s0
  %9 = sst [smem:[#allocation3]] %s1
  $region1: #{tpu_custom_call.1} parent=0
    #allocation4 [shape = 'u8[57344]{0}', space=vmem, size = 0xe000, scoped, tag = 'input window, operand 2']
    #allocation5 [shape = 's32[2]{0}', space=sflag, size = 0x8, scoped, tag = 'scoped memory for tpu_custom_call.1']
    #allocation6 [shape = 's32[2]{0}', space=sflag, size = 0x8, scoped, tag = 'scoped memory for tpu_custom_call.1']
    #allocation7 [shape = 'u8[57344]{0}', space=vmem, size = 0xe000, scoped, tag = 'output window, operand 0']
    %10 = vsyncpa [#allocation5], 0
    %s11 = scalar_lea.sflag [#allocation5], 1
    %12 = vsyncpa %s11, 0
    %13 = vsyncpa [#allocation6], 0
    %s14 = scalar_lea.sflag [#allocation6], 1
    %15 = vsyncpa %s14, 0
    loop: start=0, step=1, limit=4
    $region2: #{tpu_custom_call.1} parent=1 // loop_pre_header
      _
    $region3: #{tpu_custom_call.1} parent=1 // loop_header
      %s17 = sphi 0, %s21
      %p18 = scmp.ge.s32.totalorder %s17, 4
      %s25 = sphi 0, %s25
      %s27 = sphi 0, %s25
      %s28 = sphi 0, %s27
      %s42 = sphi 0, %s28
      %s46 = sphi 0, %s46
      %s48 = sphi 0, %s46
      %s49 = sphi 0, %s48
      %s63 = sphi 0, %s49
      %s69 = sphi 0, %s71
      %s72 = sphi 0, %s69
      %s73 = sphi 0, %s72
      %s89 = sphi 0, %s73
      %s95 = sphi 0, %s97
      %s98 = sphi 0, %s95
      %s99 = sphi 0, %s98
      %s115 = sphi 0, %s99
    $region4: #{tpu_custom_call.1} parent=1 // loop_header_branch
      %20 = sbr.rel (%p18) target = $region8
    $region5: #{tpu_custom_call.1} parent=1 // loop_body
      %s22 = ssub.s32 %s17, 1
      %s23 = ssub.s32 %s17, 2
      %s24 = sadd.s32 %s17, 1
      %s26 = sadd.s32 %s25, 1
      %p29 = scmp.eq.s32.totalorder %s17, 1
      %p30 = scmp.ne.s32.totalorder %s25, %s27
      %p31 = scmp.eq.s32.totalorder %s17, 0
      %p32 = por %p30, %p31
      %p33 = scmp.ne.s32.totalorder %s25, %s27
      %p34 = scmp.eq.s32.totalorder %s22, 1
      %p35 = por %p33, %p34
      %p36 = scmp.ne.s32.totalorder %s27, %s28
      %p37 = scmp.eq.s32.totalorder %s22, 0
      %p38 = por %p36, %p37
      %p39 = scmp.ne.s32.totalorder %s27, %s28
      %p40 = scmp.eq.s32.totalorder %s23, 1
      %p41 = por %p39, %p40
      %p43 = scmp.ne.s32.totalorder %s28, %s42
      %p44 = scmp.eq.s32.totalorder %s23, 0
      %p45 = por %p43, %p44
      %s47 = sadd.s32 %s46, 1
      %p50 = scmp.eq.s32.totalorder %s17, 1
      %p51 = scmp.ne.s32.totalorder %s46, %s48
      %p52 = scmp.eq.s32.totalorder %s17, 0
      %p53 = por %p51, %p52
      %p54 = scmp.ne.s32.totalorder %s46, %s48
      %p55 = scmp.eq.s32.totalorder %s22, 1
      %p56 = por %p54, %p55
      %p57 = scmp.ne.s32.totalorder %s48, %s49
      %p58 = scmp.eq.s32.totalorder %s22, 0
      %p59 = por %p57, %p58
      %p60 = scmp.ne.s32.totalorder %s48, %s49
      %p61 = scmp.eq.s32.totalorder %s23, 1
      %p62 = por %p60, %p61
      %p64 = scmp.ne.s32.totalorder %s49, %s63
      %p65 = scmp.eq.s32.totalorder %s23, 0
      %p66 = por %p64, %p65
      %s67 = ssub.s32 %s17, %s24
      %p68 = scmp.eq.s32.totalorder %s67, 0
      %s70 = sadd.s32 %s69, 1
      %s71 = scalar_select %p68, %s69, %s70
      %p74 = pneg %p68
      %p75 = scmp.eq.s32.totalorder %s17, 1
      %p76 = por %p74, %p75
      %p77 = scmp.ne.s32.totalorder %s69, %s72
      %p78 = scmp.eq.s32.totalorder %s17, 0
      %p79 = por %p77, %p78
      %p80 = scmp.ne.s32.totalorder %s69, %s72
      %p81 = scmp.eq.s32.totalorder %s22, 1
      %p82 = por %p80, %p81
      %p83 = scmp.ne.s32.totalorder %s72, %s73
      %p84 = scmp.eq.s32.totalorder %s22, 0
      %p85 = por %p83, %p84
      %p86 = scmp.ne.s32.totalorder %s72, %s73
      %p87 = scmp.eq.s32.totalorder %s23, 1
      %p88 = por %p86, %p87
      %p90 = scmp.ne.s32.totalorder %s73, %s89
      %p91 = scmp.eq.s32.totalorder %s23, 0
      %p92 = por %p90, %p91
      %s93 = ssub.s32 %s17, %s24
      %p94 = scmp.eq.s32.totalorder %s93, 0
      %s96 = sadd.s32 %s95, 1
      %s97 = scalar_select %p94, %s95, %s96
      %p100 = pneg %p94
      %p101 = scmp.eq.s32.totalorder %s17, 1
      %p102 = por %p100, %p101
      %p103 = scmp.ne.s32.totalorder %s95, %s98
      %p104 = scmp.eq.s32.totalorder %s17, 0
      %p105 = por %p103, %p104
      %p106 = scmp.ne.s32.totalorder %s95, %s98
      %p107 = scmp.eq.s32.totalorder %s22, 1
      %p108 = por %p106, %p107
      %p109 = scmp.ne.s32.totalorder %s98, %s99
      %p110 = scmp.eq.s32.totalorder %s22, 0
      %p111 = por %p109, %p110
      %p112 = scmp.ne.s32.totalorder %s98, %s99
      %p113 = scmp.eq.s32.totalorder %s23, 1
      %p114 = por %p112, %p113
      %p116 = scmp.ne.s32.totalorder %s99, %s115
      %p117 = scmp.eq.s32.totalorder %s23, 0
      %p118 = por %p116, %p117
      %p119 = scmp.le.s32.totalorder 1, %s17
      %p120 = scmp.lt.s32.totalorder %s17, 3
      %p121 = pnand %p119, %p120
      %p122 = pneg %p121
      // Predicated region
      $region9: #{tpu_custom_call.1} parent=5 // pred_check
        _
      $region10: #{tpu_custom_call.1} parent=5 // pred_check_branch
        %124 = sbr.rel (%p121) target = $region12
      $region11: #{tpu_custom_call.1} parent=5 // pred_region
        %s125 = ssub.s32 %s17, 1
        // Predicated region
        $region13: #{tpu_custom_call.1} parent=11 // pred_check
          %p126 = pneg %p38
        $region14: #{tpu_custom_call.1} parent=11 // pred_check_branch
          %128 = sbr.rel (%p126) target = $region16
        $region15: #{tpu_custom_call.1} parent=11 // pred_region
          _
        $region16: #{tpu_custom_call.1} parent=11 // pred_fallthru
          _
        // Predicated region
        $region17: #{tpu_custom_call.1} parent=11 // pred_check
          %p129 = pneg %p59
        $region18: #{tpu_custom_call.1} parent=11 // pred_check_branch
          %131 = sbr.rel (%p129) target = $region20
        $region19: #{tpu_custom_call.1} parent=11 // pred_region
          _
        $region20: #{tpu_custom_call.1} parent=11 // pred_fallthru
          _
      $region12: #{tpu_custom_call.1} parent=5 // pred_fallthru
        _
      %p132 = scmp.lt.s32.totalorder %s17, 2
      // Predicated region
      $region21: #{tpu_custom_call.1} parent=5 // pred_check
        %p133 = pneg %p132
      $region22: #{tpu_custom_call.1} parent=5 // pred_check_branch
        %135 = sbr.rel (%p133) target = $region24
      $region23: #{tpu_custom_call.1} parent=5 // pred_region
        // Predicated region
        $region25: #{tpu_custom_call.1} parent=23 // pred_check
          %p136 = pneg %p79
        $region26: #{tpu_custom_call.1} parent=23 // pred_check_branch
          %138 = sbr.rel (%p136) target = $region28
        $region27: #{tpu_custom_call.1} parent=23 // pred_region
          %s139 = sand.u32 %s69, 1
          %s140 = scalar_lea.sflag [#allocation5], %s139
          %s141 = sand.u32 %s69, 1
          %s142 = smul.addr %s141, 56
          %s143 = scalar_lea.vmem [#allocation4], %s142
          %s144 = smul.u32 7, %s17
          %s145 = ssub.s32 13, %s144
          %p146 = scmp.lt.s32.totalorder %s145, 7
          %s147 = scalar_select %p146, %s145, 7
          %s148 = smul.u32 128, %s147
          %s150 = ssub.s32 896, %s148
          %151 = vsyncadd %s140, %s150
          %p152 = scmp.ne.s32.totalorder 0, %s148
          %s153 = smul.addr %s144, 128
          %s154 = scalar_lea.hbm %s2, %s153
          %s155 = smul.u32 8, %s147
          %s156 = sshll.u32 %s143, 4
          %s157 = int_to_ptr.vmem [resolvable:$true] %s156
          %s158 = sshll.u32 %s155, 4
          %162 = dma.hbm_to_vmem [thread:$0]  (%p152), %s154, %s158, %s157, %s140, 128, 128, 8
        $region28: #{tpu_custom_call.1} parent=23 // pred_fallthru
          _
      $region24: #{tpu_custom_call.1} parent=5 // pred_fallthru
        _
      %p163 = scmp.le.s32.totalorder 1, %s17
      %p164 = scmp.lt.s32.totalorder %s17, 3
      %p165 = pnand %p163, %p164
      %p166 = pneg %p165
      // Predicated region
      $region29: #{tpu_custom_call.1} parent=5 // pred_check
        _
      $region30: #{tpu_custom_call.1} parent=5 // pred_check_branch
        %168 = sbr.rel (%p165) target = $region32
      $region31: #{tpu_custom_call.1} parent=5 // pred_region
        %s169 = ssub.s32 %s17, 1
        %s170 = sand.u32 %s72, 1
        %s171 = scalar_lea.sflag [#allocation5], %s170
        %s172 = sand.u32 %s72, 1
        %s173 = smul.addr %s172, 56
        %s174 = scalar_lea.vmem [#allocation4], %s173
        // Predicated region
        $region33: #{tpu_custom_call.1} parent=31 // pred_check
          %p175 = pneg %p85
        $region34: #{tpu_custom_call.1} parent=31 // pred_check_branch
          %177 = sbr.rel (%p175) target = $region36
        $region35: #{tpu_custom_call.1} parent=31 // pred_region
          %178 = dma.done %s171, 896
        $region36: #{tpu_custom_call.1} parent=31 // pred_fallthru
          _
        %p179 = pneg %p38
        %p180 = pneg %p35
        %p181 = pneg %p59
        %p182 = pneg %p56
        %s183 = sand.u32 %s72, 1
        %s184 = scalar_lea.sflag [#allocation5], %s183
        %s185 = sand.u32 %s72, 1
        %s186 = smul.addr %s185, 56
        %s187 = scalar_lea.vmem [#allocation4], %s186
        %p188 = pneg %p85
        %p189 = pneg %p82
        %p190 = pneg %p111
        %p191 = pneg %p108
        %s192 = sand.u32 %s98, 1
        %s193 = scalar_lea.sflag [#allocation6], %s192
        %s194 = sand.u32 %s98, 1
        %s195 = smul.addr %s194, 56
        %s196 = scalar_lea.vmem [#allocation7], %s195
        %s197 = smul.u32 7, %s22
        %s198 = ssub.s32 13, %s197
        %p199 = scmp.lt.s32.totalorder %s198, 7
        %s200 = scalar_select %p199, %s198, 7
        %s201 = smul.u32 128, %s200
        %s202 = smul.u32 7, %s22
        %s203 = ssub.s32 13, %s202
        %p204 = scmp.lt.s32.totalorder %s203, 7
        %s205 = scalar_select %p204, %s203, 7
        %s206 = smul.u32 128, %s205
        %s207 = sld [smem:[#allocation2]]
        %s208 = sld [smem:[#allocation3]]
        %v209 = vld [vmem:[%s174] sm:$0xff]
        %v210 = vld [vmem:[%s174 + $0x8] sm:$0xff]
        %v211 = vld [vmem:[%s174 + $0x10] sm:$0xff]
        %v212 = vld [vmem:[%s174 + $0x18] sm:$0xff]
        %v213 = vld [vmem:[%s174 + $0x20] sm:$0xff]
        %v214 = vld [vmem:[%s174 + $0x28] sm:$0xff]
        %v215 = vld [vmem:[%s174 + $0x30] sm:$0xff]
        %v216 = vstv %s207
        %v217 = vmul.f32 %v209, %v216
        %v218 = vmul.f32 %v210, %v216
        %v219 = vmul.f32 %v211, %v216
        %v220 = vmul.f32 %v212, %v216
        %v221 = vmul.f32 %v213, %v216
        %v222 = vmul.f32 %v214, %v216
        %v223 = vmul.f32 %v215, %v216
        %v224 = vstv %s208
        %v225 = vadd.f32 %v217, %v224
        %v226 = vadd.f32 %v218, %v224
        %v227 = vadd.f32 %v219, %v224
        %v228 = vadd.f32 %v220, %v224
        %v229 = vadd.f32 %v221, %v224
        %v230 = vadd.f32 %v222, %v224
        %v231 = vadd.f32 %v223, %v224
        %v232 = vmul.f32 %v225, 0.5
        %v233 = vmul.f32 %v226, 0.5
        %v234 = vmul.f32 %v227, 0.5
        %v235 = vmul.f32 %v228, 0.5
        %v236 = vmul.f32 %v229, 0.5
        %v237 = vmul.f32 %v230, 0.5
        %v238 = vmul.f32 %v231, 0.5
        %v239 = vmul.f32 %v225, %v225
        %v240 = vmul.f32 %v226, %v226
        %v241 = vmul.f32 %v227, %v227
        %v242 = vmul.f32 %v228, %v228
        %v243 = vmul.f32 %v229, %v229
        %v244 = vmul.f32 %v230, %v230
        %v245 = vmul.f32 %v231, %v231
        %v246 = vmul.f32 %v239, 0.035677407
        %v247 = vmul.f32 %v240, 0.035677407
        %v248 = vmul.f32 %v241, 0.035677407
        %v249 = vmul.f32 %v242, 0.035677407
        %v250 = vmul.f32 %v243, 0.035677407
        %v251 = vmul.f32 %v244, 0.035677407
        %v252 = vmul.f32 %v245, 0.035677407
        %v253 = vadd.f32 %v246, 0.7978846
        %v254 = vadd.f32 %v247, 0.7978846
        %v255 = vadd.f32 %v248, 0.7978846
        %v256 = vadd.f32 %v249, 0.7978846
        %v257 = vadd.f32 %v250, 0.7978846
        %v258 = vadd.f32 %v251, 0.7978846
        %v259 = vadd.f32 %v252, 0.7978846
        %v260 = vmul.f32 %v225, %v253
        %v261 = vmul.f32 %v226, %v254
        %v262 = vmul.f32 %v227, %v255
        %v263 = vmul.f32 %v228, %v256
        %v264 = vmul.f32 %v229, %v257
        %v265 = vmul.f32 %v230, %v258
        %v266 = vmul.f32 %v231, %v259
        %v267 = vtanh.pop %v260
        %v268 = vtanh.pop %v261
        %v269 = vtanh.pop %v262
        %v270 = vtanh.pop %v263
        %v271 = vtanh.pop %v264
        %v272 = vtanh.pop %v265
        %v273 = vtanh.pop %v266
        %v274 = vmul.f32 %v232, %v267
        %v275 = vmul.f32 %v233, %v268
        %v276 = vmul.f32 %v234, %v269
        %v277 = vmul.f32 %v235, %v270
        %v278 = vmul.f32 %v236, %v271
        %v279 = vmul.f32 %v237, %v272
        %v280 = vmul.f32 %v238, %v273
        %v281 = vadd.f32 %v232, %v274
        %v282 = vadd.f32 %v233, %v275
        %v283 = vadd.f32 %v234, %v276
        %v284 = vadd.f32 %v235, %v277
        %v285 = vadd.f32 %v236, %v278
        %v286 = vadd.f32 %v237, %v279
        %v287 = vadd.f32 %v238, %v280
        %288 = vst [vmem:[%s196] sm:$0xff] %v281
        %289 = vst [vmem:[%s196 + $0x8] sm:$0xff] %v282
        %290 = vst [vmem:[%s196 + $0x10] sm:$0xff] %v283
        %291 = vst [vmem:[%s196 + $0x18] sm:$0xff] %v284
        %292 = vst [vmem:[%s196 + $0x20] sm:$0xff] %v285
        %293 = vst [vmem:[%s196 + $0x28] sm:$0xff] %v286
        %294 = vst [vmem:[%s196 + $0x30] sm:$0xff] %v287
        %s295 = sand.u32 %s98, 1
        %s296 = scalar_lea.sflag [#allocation6], %s295
        %s297 = sand.u32 %s98, 1
        %s298 = smul.addr %s297, 56
        %s299 = scalar_lea.vmem [#allocation7], %s298
        // Predicated region
        $region37: #{tpu_custom_call.1} parent=31 // pred_check
          %p300 = pneg %p108
        $region38: #{tpu_custom_call.1} parent=31 // pred_check_branch
          %302 = sbr.rel (%p300) target = $region40
        $region39: #{tpu_custom_call.1} parent=31 // pred_region
          %s303 = smul.u32 7, %s22
          %s304 = ssub.s32 13, %s303
          %p305 = scmp.lt.s32.totalorder %s304, 7
          %s306 = scalar_select %p305, %s304, 7
          %s307 = smul.u32 128, %s306
          %s309 = ssub.s32 896, %s307
          %310 = vsyncadd %s296, %s309
          %p311 = scmp.ne.s32.totalorder 0, %s307
          %s312 = smul.addr %s303, 128
          %s313 = scalar_lea.hbm %s3, %s312
          %s314 = smul.u32 8, %s306
          %s315 = sshll.u32 %s299, 4
          %s316 = int_to_ptr.vmem [resolvable:$true] %s315
          %s317 = sshll.u32 %s314, 4
          %321 = dma.vmem_to_hbm [thread:$0]  (%p311), %s316, %s317, %s313, %s296, 128, 128, 8
        $region40: #{tpu_custom_call.1} parent=31 // pred_fallthru
          _
      $region32: #{tpu_custom_call.1} parent=5 // pred_fallthru
        _
      %p322 = scmp.le.s32.totalorder 2, %s17
      // Predicated region
      $region41: #{tpu_custom_call.1} parent=5 // pred_check
        %p323 = pneg %p322
      $region42: #{tpu_custom_call.1} parent=5 // pred_check_branch
        %325 = sbr.rel (%p323) target = $region44
      $region43: #{tpu_custom_call.1} parent=5 // pred_region
        %s326 = ssub.s32 %s17, 2
        // Predicated region
        $region45: #{tpu_custom_call.1} parent=43 // pred_check
          %p327 = pneg %p114
        $region46: #{tpu_custom_call.1} parent=43 // pred_check_branch
          %329 = sbr.rel (%p327) target = $region48
        $region47: #{tpu_custom_call.1} parent=43 // pred_region
          %s330 = sand.u32 %s99, 1
          %s331 = scalar_lea.sflag [#allocation6], %s330
          %s332 = sand.u32 %s99, 1
          %s333 = smul.addr %s332, 56
          %s334 = scalar_lea.vmem [#allocation7], %s333
          %335 = dma.done %s331, 896
        $region48: #{tpu_custom_call.1} parent=43 // pred_fallthru
          _
      $region44: #{tpu_custom_call.1} parent=5 // pred_fallthru
        _
    $region6: #{tpu_custom_call.1} parent=1 // loop_footer
      %s21 = sadd.s32 1, %s17
    $region7: #{tpu_custom_call.1} parent=1 // loop_footer_branch
      %16 = sbr.rel target = $region3
    $region8: #{tpu_custom_call.1} parent=1 // loop_exit
      _
    %336 = vsyncpa [#allocation5], 1
    %s337 = scalar_lea.sflag [#allocation5], 1
    %338 = vsyncpa %s337, 1
    %339 = vsyncpa [#allocation6], 1
    %s340 = scalar_lea.sflag [#allocation6], 1
    %341 = vsyncpa %s340, 1

</llo_original>
